<compile_context>
chip_gen: v7x
topology: tpu7x:2x2x1
jax: 0.10.0
libtpu: 0.0.40
codegen_flags: <defaults>
</compile_context>

<pallas_src>
import functools

import jax
import jax.numpy as jnp
from jax.experimental import pallas as pl
from jax.experimental.pallas import tpu as pltpu

EPS = 1e-6
NEG_INF = -1e30
# Explicit scoped-VMEM budget: fits v7x's 64 MiB physical VMEM with headroom,
# and is above the 16/32 MiB default scoped limits on v5e/v6e.
VMEM_LIMIT_BYTES = 48 * 1024 * 1024


def _rmsnorm_f32(x, w):
    var = jnp.mean(x * x, axis=-1, keepdims=True)
    return x * jax.lax.rsqrt(var + EPS) * w


# ----------------------------- Pallas kernels ------------------------------ #

def proj_kernel(x_ref, wx_ref, wc_ref, qnw_ref, kvnw_ref, cos_ref, sin_ref,
                q_ref, kv_ref, *, H, d_cq, d_ckv, r):
    """Fused projections + RMSNorm + RoPE for one (batch, seq-tile) block.

    Two MXU passes total: x through the concatenated x-side weights and the
    normalized c_Q through the concatenated q-side weights.  Emits:
      q_ref  : [1, H, ts, d_ckv + r]   packed per head  [q_C_h | rot(q_R_h)]
      kv_ref : [1, ts, d_ckv + r]      packed latent K  [c_KV  | rot(k_R)]
    (the latent V is the first d_ckv columns of kv_ref).
    """
    x = x_ref[0]                                             # [ts, dm] bf16
    cos = cos_ref[...]                                       # [ts, r]  f32
    sin = sin_ref[...]                                       # [ts, r]  f32 (sign folded)

    # --- x @ [W_DQ | W_DWK | W_KR | W_KRsw] ---------------------------------
    xo = jnp.dot(x, wx_ref[...], preferred_element_type=jnp.float32)
    cq = _rmsnorm_f32(xo[:, :d_cq], qnw_ref[...])                      # f32 stats
    ckv = _rmsnorm_f32(xo[:, d_cq:d_cq + d_ckv], kvnw_ref[...])
    kr0 = xo[:, d_cq + d_ckv:d_cq + d_ckv + r]
    kr1 = xo[:, d_cq + d_ckv + r:]
    kr = kr0 * cos + kr1 * sin                                         # fused RoPE

    kv_ref[0, :, :d_ckv] = ckv.astype(kv_ref.dtype)
    kv_ref[0, :, d_ckv:] = kr.astype(kv_ref.dtype)

    # --- c_Q @ [W_UQ_UK | W_QR | W_QRsw]  (attention scale pre-folded) ------
    cq_b = cq.astype(jnp.bfloat16)
    co = jnp.dot(cq_b, wc_ref[...], preferred_element_type=jnp.float32)
    qc = co[:, :H * d_ckv]
    qr0 = co[:, H * d_ckv:H * (d_ckv + r)]
    qr1 = co[:, H * (d_ckv + r):]

    for h in range(H):                        # static head loop, static slices
        qrh = qr0[:, h * r:(h + 1) * r] * cos + qr1[:, h * r:(h + 1) * r] * sin
        q_ref[0, h, :, :d_ckv] = qc[:, h * d_ckv:(h + 1) * d_ckv].astype(q_ref.dtype)
        q_ref[0, h, :, d_ckv:] = qrh.astype(q_ref.dtype)


def attn_kernel(q_ref, kv_ref, o_ref, m_sc, l_sc, acc_sc,
                *, H, d_ckv, r, tq, tk):
    """Flash (online-softmax) causal attention on the shared latent K/V.

    Heads are folded into the matmul M dimension: one [H*tq, dk] @ [tk, dk]^T
    score matmul and one [H*tq, tk] @ [tk, d_ckv] PV matmul per KV tile.
    """
    ki = pl.program_id(2)

    @pl.when(ki == 0)
    def _():
        m_sc[...] = jnp.full_like(m_sc, -jnp.inf)
        l_sc[...] = jnp.zeros_like(l_sc)
        acc_sc[...] = jnp.zeros_like(acc_sc)

    q = q_ref[0].reshape(H * tq, d_ckv + r)          # heads folded into M (bf16)
    kv = kv_ref[0]                                   # [tk, d_ckv + r]      (bf16)

    s = jax.lax.dot_general(q, kv, (((1,), (1,)), ((), ())),
                            preferred_element_type=jnp.float32)   # [H*tq, tk]

    qpos = pl.program_id(1) * tq + (
        jax.lax.broadcasted_iota(jnp.int32, (H * tq, tk), 0) % tq)
    kpos = ki * tk + jax.lax.broadcasted_iota(jnp.int32, (H * tq, tk), 1)
    s = jnp.where(qpos >= kpos, s, NEG_INF)          # causal mask

    m_prev = m_sc[...]
    m_new = jnp.maximum(m_prev, jnp.max(s, axis=-1, keepdims=True))
    alpha = jnp.exp(m_prev - m_new)
    p = jnp.exp(s - m_new)                                            # f32
    l_sc[...] = alpha * l_sc[...] + jnp.sum(p, axis=-1, keepdims=True)
    acc_sc[...] = alpha * acc_sc[...] + jnp.dot(
        p.astype(jnp.bfloat16), kv[:, :d_ckv],       # latent V = c_KV columns
        preferred_element_type=jnp.float32)
    m_sc[...] = m_new

    @pl.when(ki == pl.num_programs(2) - 1)
    def _():
        o = acc_sc[...] * pl.reciprocal(l_sc[...], approx=True)
        # direct per-head stores into the lane-dense [tq, H*d_ckv] output block
        for h in range(H):
            o_ref[0, :, h * d_ckv:(h + 1) * d_ckv] = (
                o[h * tq:(h + 1) * tq, :].astype(o_ref.dtype))


def matmul_kernel(a_ref, b_ref, o_ref, acc_ref):
    @pl.when(pl.program_id(2) == 0)
    def _():
        acc_ref[...] = jnp.zeros_like(acc_ref)
    acc_ref[...] += jnp.dot(a_ref[...], b_ref[...],
                            preferred_element_type=jnp.float32)

    @pl.when(pl.program_id(2) == pl.num_programs(2) - 1)
    def _():
        o_ref[...] = acc_ref[...].astype(o_ref.dtype)


def tiled_matmul(a, b, out_dtype, tm=256, tn=256, tk=512):
    """Standard tiled matmul: [M,K] @ [K,N] -> [M,N] (f32 accumulation)."""
    M, K = a.shape
    _, N = b.shape
    tm, tn, tk = min(tm, M), min(tn, N), min(tk, K)
    assert M % tm == 0 and N % tn == 0 and K % tk == 0
    return pl.pallas_call(
        matmul_kernel,
        out_shape=jax.ShapeDtypeStruct((M, N), out_dtype),
        grid=(M // tm, N // tn, K // tk),
        in_specs=[pl.BlockSpec((tm, tk), lambda i, j, k: (i, k)),
                  pl.BlockSpec((tk, tn), lambda i, j, k: (k, j))],
        out_specs=pl.BlockSpec((tm, tn), lambda i, j, k: (i, j)),
        scratch_shapes=[pltpu.VMEM((tm, tn), jnp.float32)],
        compiler_params=pltpu.CompilerParams(
            dimension_semantics=("parallel", "parallel", "arbitrary"),
            vmem_limit_bytes=VMEM_LIMIT_BYTES),
    )(a, b)


# ------------------------------- wrapper ----------------------------------- #

def _swap_pairs_cols(w):
    """Swap adjacent output columns: W_sw[:, 2i] = W[:, 2i+1] and vice versa."""
    din, dout = w.shape
    return w.reshape(din, dout // 2, 2)[:, :, ::-1].reshape(din, dout)


def mla_inference_forward(x, params, cos, sin, *, ts=256, tq=256, tk=256):
    B, S, dm = x.shape
    H, Dh, r = params["H"], params["Dh"], params["r"]
    d_cq = params["W_DQ"].shape[1]
    d_ckv = params["W_DWK"].shape[1]
    dk = d_ckv + r
    scale = (Dh + r) ** -0.5
    bf16 = jnp.bfloat16

    ts, tq, tk = min(ts, S), min(tq, S), min(tk, S)
    assert S % ts == 0 and S % tq == 0 and S % tk == 0

    # ---- one-time weight prep: bf16, attention scale folded into q-side
    # weights, RoPE via pair-swapped weight copies, shared-LHS weights merged --
    wx = jnp.concatenate(
        [params["W_DQ"], params["W_DWK"], params["W_KR"],
         _swap_pairs_cols(params["W_KR"])], axis=1).astype(bf16)
    wc = jnp.concatenate(
        [params["W_UQ_UK"] * scale, params["W_QR"] * scale,
         _swap_pairs_cols(params["W_QR"]) * scale], axis=1).astype(bf16)
    wov = params["W_U_OV"].reshape(H * d_ckv, dm).astype(bf16)
    qnw = params["q_norm_w"][None, :].astype(jnp.float32)
    kvnw = params["kv_norm_w"][None, :].astype(jnp.float32)

    # interleaved RoPE tables, shared by all heads (NOT tiled over H):
    #   rot(x)[2i]   = x[2i]*cos[i] - x[2i+1]*sin[i]
    #   rot(x)[2i+1] = x[2i]*sin[i] + x[2i+1]*cos[i]
    cos_il = jnp.repeat(cos, 2, axis=-1)                           # [S, r]
    sign = jnp.tile(jnp.array([-1.0, 1.0], jnp.float32), r // 2)
    sin_il = jnp.repeat(sin, 2, axis=-1) * sign                    # [S, r]

    xb = x.astype(bf16)

    def resident(arr):
        # constant-index block, stays resident across the whole grid
        # TODO(synk): pipeline_mode=pl.Buffered(1) here would drop the double
        #             buffer for these never-changing operands.
        return pl.BlockSpec(arr.shape, lambda b, si: (0,) * arr.ndim)

    # ---- kernel 1: fused projections + RMSNorm + RoPE, tiled over (B, S) ----
    q_pack, kv_pack = pl.pallas_call(
        functools.partial(proj_kernel, H=H, d_cq=d_cq, d_ckv=d_ckv, r=r),
        out_shape=(
            jax.ShapeDtypeStruct((B, H, S, dk), bf16),   # head-major packed q
            jax.ShapeDtypeStruct((B, S, dk), bf16),      # packed latent K/V
        ),
        grid=(B, S // ts),
        in_specs=[
            pl.BlockSpec((1, ts, dm), lambda b, si: (b, si, 0)),   # x
            resident(wx), resident(wc), resident(qnw), resident(kvnw),
            pl.BlockSpec((ts, r), lambda b, si: (si, 0)),          # cos
            pl.BlockSpec((ts, r), lambda b, si: (si, 0)),          # sin
        ],
        out_specs=(
            pl.BlockSpec((1, H, ts, dk), lambda b, si: (b, 0, si, 0)),
            pl.BlockSpec((1, ts, dk), lambda b, si: (b, si, 0)),
        ),
        compiler_params=pltpu.CompilerParams(
            dimension_semantics=("parallel", "parallel"),
            vmem_limit_bytes=VMEM_LIMIT_BYTES),
    )(xb, wx, wc, qnw, kvnw, cos_il, sin_il)

    # ---- kernel 2: flash-tiled latent attention (heads folded into M) ------
    o_lat = pl.pallas_call(
        functools.partial(attn_kernel, H=H, d_ckv=d_ckv, r=r, tq=tq, tk=tk),
        out_shape=jax.ShapeDtypeStruct((B, S, H * d_ckv), bf16),
        grid=(B, S // tq, S // tk),
        in_specs=[
            pl.BlockSpec((1, H, tq, dk), lambda b, qi, ki: (b, 0, qi, 0)),
            pl.BlockSpec((1, tk, dk), lambda b, qi, ki: (b, ki, 0)),
        ],
        out_specs=pl.BlockSpec((1, tq, H * d_ckv), lambda b, qi, ki: (b, qi, 0)),
        scratch_shapes=[
            pltpu.VMEM((H * tq, 1), jnp.float32),       # running max m
            pltpu.VMEM((H * tq, 1), jnp.float32),       # running denom l
            pltpu.VMEM((H * tq, d_ckv), jnp.float32),   # output accumulator
        ],
        compiler_params=pltpu.CompilerParams(
            dimension_semantics=("parallel", "parallel", "arbitrary"),
            vmem_limit_bytes=VMEM_LIMIT_BYTES),
    )(q_pack, kv_pack)

    # ---- kernel 3: absorbed OV projection as one tiled matmul --------------
    out = tiled_matmul(o_lat.reshape(B * S, H * d_ckv), wov,
                       out_dtype=jnp.float32)
    return out.reshape(B, S, dm)


# ------------------------------ params / reference ------------------------- #

def init_params(key, d_model, H, Dh, d_cq, d_ckv, r):
    ks = jax.random.split(key, 8)
    s = 0.05
    W_DQ = jax.random.normal(ks[0], (d_model, d_cq), jnp.float32) * s
    W_DWK = jax.random.normal(ks[1], (d_model, d_ckv), jnp.float32) * s
    W_UQ = jax.random.normal(ks[2], (H, Dh, d_cq), jnp.float32) * s
    W_UK = jax.random.normal(ks[3], (H, Dh, d_ckv), jnp.float32) * s
    W_UV = jax.random.normal(ks[4], (H, Dh, d_ckv), jnp.float32) * s
    W_QR = jax.random.normal(ks[5], (d_cq, H * r), jnp.float32) * s
    W_KR = jax.random.normal(ks[6], (d_model, r), jnp.float32) * s
    W_O = jax.random.normal(ks[7], (H, Dh, d_model), jnp.float32) * s  # W_O.T per head

    # fuse_weights(): absorbed projections
    fused = jnp.einsum('hdc,hdk->hck', W_UQ, W_UK)                    # [H,d_cq,d_ckv]
    W_UQ_UK = fused.transpose(1, 0, 2).reshape(d_cq, H * d_ckv)
    W_U_OV = jnp.einsum('hdc,hdm->hcm', W_UV, W_O)                    # [H,d_ckv,dm]

    return dict(W_DQ=W_DQ, W_DWK=W_DWK, W_UQ_UK=W_UQ_UK, W_QR=W_QR, W_KR=W_KR,
                W_U_OV=W_U_OV,
                q_norm_w=jnp.ones((d_cq,), jnp.float32),
                kv_norm_w=jnp.ones((d_ckv,), jnp.float32),
                H=H, Dh=Dh, r=r)


def apply_rope_real(q, k, cos, sin):
    # Real-arithmetic rotary on interleaved pairs (reference only).
    def rot(x):
        x0 = x[..., 0::2]
        x1 = x[..., 1::2]
        o0 = x0 * cos - x1 * sin
        o1 = x0 * sin + x1 * cos
        return jnp.stack([o0, o1], axis=-1).reshape(x.shape)
    return rot(q), rot(k)


def reference_forward(x, params, cos, sin):
    # Pure-JAX f32 reference of the same PyTorch semantics (kv_cache=None path).
    B, S, dm = x.shape
    H, Dh, r = params["H"], params["Dh"], params["r"]
    d_ckv = params["W_DWK"].shape[1]
    scale = (Dh + r) ** -0.5
    c_Q = _rmsnorm_f32(x @ params["W_DQ"], params["q_norm_w"])
    c_KV = _rmsnorm_f32(x @ params["W_DWK"], params["kv_norm_w"])
    q_C = (c_Q @ params["W_UQ_UK"]).reshape(B, S, H, d_ckv).transpose(0, 2, 1, 3)
    q_R = (c_Q @ params["W_QR"]).reshape(B, S, H, r).transpose(0, 2, 1, 3)
    k_R = (x @ params["W_KR"])[:, None]
    q_R, k_R = apply_rope_real(q_R, k_R, cos, sin)
    q = jnp.concatenate([q_C, q_R], axis=-1)
    k = jnp.concatenate([c_KV[:, None], k_R], axis=-1)
    v = c_KV[:, None]
    s_mat = jnp.einsum('bhqd,bgkd->bhqk', q, k) * scale
    mask = jnp.tril(jnp.ones((S, S), dtype=bool))
    s_mat = jnp.where(mask, s_mat, -jnp.inf)
    p = jax.nn.softmax(s_mat, axis=-1)
    o = jnp.einsum('bhqk,bgkd->bhqd', p, v)
    return jnp.einsum('bhsd,hdm->bsm', o, params["W_U_OV"])


if __name__ == "__main__":
    # small config: d_model=32, num_heads=4, head_dim=16, d_ckv=d_cq=32,
    # head_dim_decoupled_qk = head_dim//2 = 8, seq=8, batch=2
    B, S, d_model = 2, 8, 32
    H, Dh = 4, 16
    d_ckv, d_cq = 32, 32
    r = Dh // 2

    key = jax.random.PRNGKey(0)
    kx, kp = jax.random.split(key)
    x = jax.random.normal(kx, (B, S, d_model), jnp.float32)
    params = init_params(kp, d_model, H, Dh, d_cq, d_ckv, r)

    # pos_info (freq_cis) represented by cos/sin of shape [S, r//2]
    half = r // 2
    inv_freq = 1.0 / (10000.0 ** (jnp.arange(half, dtype=jnp.float32) / half))
    ang = jnp.arange(S, dtype=jnp.float32)[:, None] * inv_freq[None, :]
    cos, sin = jnp.cos(ang), jnp.sin(ang)

    out = mla_inference_forward(x, params, cos, sin)
    out = jax.block_until_ready(out)

    ref = reference_forward(x, params, cos, sin)
    assert out.shape == (B, S, d_model)
    err = float(jnp.max(jnp.abs(out - ref)))
    # bf16 operands with f32 accumulation vs. pure-f32 reference
    assert err < 2e-2, err
    print("KERNEL_OK")
</pallas_src>

<mosaic_0001>
module attributes {stable_mosaic.version = 11 : i64} {
  func.func @proj_kernel(%arg0: i32, %arg1: i32, %arg2: memref<1x8x32xbf16, #tpu.memory_space<vmem>>, %arg3: memref<32x80xbf16, #tpu.memory_space<vmem>>, %arg4: memref<32x192xbf16, #tpu.memory_space<vmem>>, %arg5: memref<1x32xf32, #tpu.memory_space<vmem>>, %arg6: memref<1x32xf32, #tpu.memory_space<vmem>>, %arg7: memref<8x8xf32, #tpu.memory_space<vmem>>, %arg8: memref<8x8xf32, #tpu.memory_space<vmem>>, %arg9: memref<1x4x8x40xbf16, #tpu.memory_space<vmem>>, %arg10: memref<1x8x40xbf16, #tpu.memory_space<vmem>>) attributes {dimension_semantics = [#tpu.dimension_semantics<parallel>, #tpu.dimension_semantics<parallel>], iteration_bounds = array<i64: 2, 1>, scalar_prefetch = 0 : i64, scratch_operands = 0 : i64, tpu.core_type = #tpu.core_type<tc>, window_params = [{transform_indices = @transform_0, window_bounds = array<i64: 1, 8, 32>}, {pipeline_mode = #tpu.pipeline_mode<synchronous>, transform_indices = @transform_1, window_bounds = array<i64: 32, 80>}, {pipeline_mode = #tpu.pipeline_mode<synchronous>, transform_indices = @transform_2, window_bounds = array<i64: 32, 192>}, {pipeline_mode = #tpu.pipeline_mode<synchronous>, transform_indices = @transform_3, window_bounds = array<i64: 1, 32>}, {pipeline_mode = #tpu.pipeline_mode<synchronous>, transform_indices = @transform_4, window_bounds = array<i64: 1, 32>}, {transform_indices = @transform_5, window_bounds = array<i64: 8, 8>}, {transform_indices = @transform_6, window_bounds = array<i64: 8, 8>}, {transform_indices = @transform_7, window_bounds = array<i64: 1, 4, 8, 40>}, {transform_indices = @transform_8, window_bounds = array<i64: 1, 8, 40>}]} {
    %c0 = arith.constant 0 : index
    %c0_0 = arith.constant 0 : index
    %c0_1 = arith.constant 0 : index
    %0 = vector.load %arg2[%c0, %c0_0, %c0_1] : memref<1x8x32xbf16, #tpu.memory_space<vmem>>, vector<1x8x32xbf16>
    %1 = vector.shape_cast %0 : vector<1x8x32xbf16> to vector<8x32xbf16>
    %c0_2 = arith.constant 0 : index
    %c0_3 = arith.constant 0 : index
    %2 = vector.load %arg7[%c0_2, %c0_3] : memref<8x8xf32, #tpu.memory_space<vmem>>, vector<8x8xf32>
    %c0_4 = arith.constant 0 : index
    %c0_5 = arith.constant 0 : index
    %3 = vector.load %arg8[%c0_4, %c0_5] : memref<8x8xf32, #tpu.memory_space<vmem>>, vector<8x8xf32>
    %c0_6 = arith.constant 0 : index
    %c0_7 = arith.constant 0 : index
    %4 = vector.load %arg3[%c0_6, %c0_7] : memref<32x80xbf16, #tpu.memory_space<vmem>>, vector<32x80xbf16>
    %cst = arith.constant dense<0.000000e+00> : vector<8x80xf32>
    %5 = tpu.matmul %1, %4, %cst {dimension_numbers = #tpu.dot_dimension_numbers<[1], [0], [0], [1], [0, 0, 1, 1], [], []>} : vector<8x32xbf16>, vector<32x80xbf16>, vector<8x80xf32> -> vector<8x80xf32>
    %6 = vector.extract_strided_slice %5 {offsets = [0, 0], sizes = [8, 32], strides = [1, 1]} : vector<8x80xf32> to vector<8x32xf32>
    %c0_8 = arith.constant 0 : index
    %c0_9 = arith.constant 0 : index
    %7 = vector.load %arg5[%c0_8, %c0_9] : memref<1x32xf32, #tpu.memory_space<vmem>>, vector<1x32xf32>
    %8 = arith.mulf %6, %6 : vector<8x32xf32>
    %cst_10 = arith.constant dense<0.000000e+00> : vector<8xf32>
    %9 = vector.multi_reduction <add>, %8, %cst_10 [1] : vector<8x32xf32> to vector<8xf32>
    %10 = vector.shape_cast %9 : vector<8xf32> to vector<8x1xf32>
    %cst_11 = arith.constant 3.200000e+01 : f32
    %11 = vector.broadcast %cst_11 : f32 to vector<8x1xf32>
    %12 = arith.divf %10, %11 : vector<8x1xf32>
    %cst_12 = arith.constant 9.99999997E-7 : f32
    %13 = vector.broadcast %cst_12 : f32 to vector<8x1xf32>
    %14 = arith.addf %12, %13 : vector<8x1xf32>
    %15 = math.rsqrt %14 : vector<8x1xf32>
    %16 = vector.broadcast %15 : vector<8x1xf32> to vector<8x32xf32>
    %17 = arith.mulf %6, %16 : vector<8x32xf32>
    %18 = vector.broadcast %7 : vector<1x32xf32> to vector<8x32xf32>
    %19 = arith.mulf %17, %18 : vector<8x32xf32>
    %20 = vector.extract_strided_slice %5 {offsets = [0, 32], sizes = [8, 32], strides = [1, 1]} : vector<8x80xf32> to vector<8x32xf32>
    %c0_13 = arith.constant 0 : index
    %c0_14 = arith.constant 0 : index
    %21 = vector.load %arg6[%c0_13, %c0_14] : memref<1x32xf32, #tpu.memory_space<vmem>>, vector<1x32xf32>
    %22 = arith.mulf %20, %20 : vector<8x32xf32>
    %cst_15 = arith.constant dense<0.000000e+00> : vector<8xf32>
    %23 = vector.multi_reduction <add>, %22, %cst_15 [1] : vector<8x32xf32> to vector<8xf32>
    %24 = vector.shape_cast %23 : vector<8xf32> to vector<8x1xf32>
    %cst_16 = arith.constant 3.200000e+01 : f32
    %25 = vector.broadcast %cst_16 : f32 to vector<8x1xf32>
    %26 = arith.divf %24, %25 : vector<8x1xf32>
    %cst_17 = arith.constant 9.99999997E-7 : f32
    %27 = vector.broadcast %cst_17 : f32 to vector<8x1xf32>
    %28 = arith.addf %26, %27 : vector<8x1xf32>
    %29 = math.rsqrt %28 : vector<8x1xf32>
    %30 = vector.broadcast %29 : vector<8x1xf32> to vector<8x32xf32>
    %31 = arith.mulf %20, %30 : vector<8x32xf32>
    %32 = vector.broadcast %21 : vector<1x32xf32> to vector<8x32xf32>
    %33 = arith.mulf %31, %32 : vector<8x32xf32>
    %34 = vector.extract_strided_slice %5 {offsets = [0, 64], sizes = [8, 8], strides = [1, 1]} : vector<8x80xf32> to vector<8x8xf32>
    %35 = vector.extract_strided_slice %5 {offsets = [0, 72], sizes = [8, 8], strides = [1, 1]} : vector<8x80xf32> to vector<8x8xf32>
    %36 = arith.mulf %34, %2 : vector<8x8xf32>
    %37 = arith.mulf %35, %3 : vector<8x8xf32>
    %38 = arith.addf %36, %37 : vector<8x8xf32>
    %39 = arith.truncf %33 : vector<8x32xf32> to vector<8x32xbf16>
    %c0_18 = arith.constant 0 : index
    %c0_19 = arith.constant 0 : index
    %c0_20 = arith.constant 0 : index
    %40 = vector.load %arg10[%c0_18, %c0_19, %c0_20] : memref<1x8x40xbf16, #tpu.memory_space<vmem>>, vector<1x8x32xbf16>
    %41 = vector.shape_cast %40 : vector<1x8x32xbf16> to vector<8x32xbf16>
    %42 = vector.shape_cast %39 : vector<8x32xbf16> to vector<1x8x32xbf16>
    tpu.vector_store %arg10[%c0_18, %c0_19, %c0_20], %42 {strides = array<i32>} : memref<1x8x40xbf16, #tpu.memory_space<vmem>>, vector<1x8x32xbf16>,
    %43 = arith.truncf %38 : vector<8x8xf32> to vector<8x8xbf16>
    %c0_21 = arith.constant 0 : index
    %c0_22 = arith.constant 0 : index
    %c32 = arith.constant 32 : index
    %44 = vector.load %arg10[%c0_21, %c0_22, %c32] : memref<1x8x40xbf16, #tpu.memory_space<vmem>>, vector<1x8x8xbf16>
    %45 = vector.shape_cast %44 : vector<1x8x8xbf16> to vector<8x8xbf16>
    %46 = vector.shape_cast %43 : vector<8x8xbf16> to vector<1x8x8xbf16>
    tpu.vector_store %arg10[%c0_21, %c0_22, %c32], %46 {strides = array<i32>} : memref<1x8x40xbf16, #tpu.memory_space<vmem>>, vector<1x8x8xbf16>,
    %47 = arith.truncf %19 : vector<8x32xf32> to vector<8x32xbf16>
    %c0_23 = arith.constant 0 : index
    %c0_24 = arith.constant 0 : index
    %48 = vector.load %arg4[%c0_23, %c0_24] : memref<32x192xbf16, #tpu.memory_space<vmem>>, vector<32x192xbf16>
    %cst_25 = arith.constant dense<0.000000e+00> : vector<8x192xf32>
    %49 = tpu.matmul %47, %48, %cst_25 {dimension_numbers = #tpu.dot_dimension_numbers<[1], [0], [0], [1], [0, 0, 1, 1], [], []>} : vector<8x32xbf16>, vector<32x192xbf16>, vector<8x192xf32> -> vector<8x192xf32>
    %50 = vector.extract_strided_slice %49 {offsets = [0, 0], sizes = [8, 128], strides = [1, 1]} : vector<8x192xf32> to vector<8x128xf32>
    %51 = vector.extract_strided_slice %49 {offsets = [0, 128], sizes = [8, 32], strides = [1, 1]} : vector<8x192xf32> to vector<8x32xf32>
    %52 = vector.extract_strided_slice %49 {offsets = [0, 160], sizes = [8, 32], strides = [1, 1]} : vector<8x192xf32> to vector<8x32xf32>
    %53 = vector.extract_strided_slice %51 {offsets = [0, 0], sizes = [8, 8], strides = [1, 1]} : vector<8x32xf32> to vector<8x8xf32>
    %54 = arith.mulf %53, %2 : vector<8x8xf32>
    %55 = vector.extract_strided_slice %52 {offsets = [0, 0], sizes = [8, 8], strides = [1, 1]} : vector<8x32xf32> to vector<8x8xf32>
    %56 = arith.mulf %55, %3 : vector<8x8xf32>
    %57 = arith.addf %54, %56 : vector<8x8xf32>
    %58 = vector.extract_strided_slice %50 {offsets = [0, 0], sizes = [8, 32], strides = [1, 1]} : vector<8x128xf32> to vector<8x32xf32>
    %59 = arith.truncf %58 : vector<8x32xf32> to vector<8x32xbf16>
    %c0_26 = arith.constant 0 : index
    %c0_27 = arith.constant 0 : index
    %c0_28 = arith.constant 0 : index
    %c0_29 = arith.constant 0 : index
    %60 = vector.load %arg9[%c0_26, %c0_27, %c0_28, %c0_29] : memref<1x4x8x40xbf16, #tpu.memory_space<vmem>>, vector<1x1x8x32xbf16>
    %61 = vector.shape_cast %60 : vector<1x1x8x32xbf16> to vector<8x32xbf16>
    %62 = vector.shape_cast %59 : vector<8x32xbf16> to vector<1x1x8x32xbf16>
    tpu.vector_store %arg9[%c0_26, %c0_27, %c0_28, %c0_29], %62 {strides = array<i32>} : memref<1x4x8x40xbf16, #tpu.memory_space<vmem>>, vector<1x1x8x32xbf16>,
    %63 = arith.truncf %57 : vector<8x8xf32> to vector<8x8xbf16>
    %c0_30 = arith.constant 0 : index
    %c0_31 = arith.constant 0 : index
    %c0_32 = arith.constant 0 : index
    %c32_33 = arith.constant 32 : index
    %64 = vector.load %arg9[%c0_30, %c0_31, %c0_32, %c32_33] : memref<1x4x8x40xbf16, #tpu.memory_space<vmem>>, vector<1x1x8x8xbf16>
    %65 = vector.shape_cast %64 : vector<1x1x8x8xbf16> to vector<8x8xbf16>
    %66 = vector.shape_cast %63 : vector<8x8xbf16> to vector<1x1x8x8xbf16>
    tpu.vector_store %arg9[%c0_30, %c0_31, %c0_32, %c32_33], %66 {strides = array<i32>} : memref<1x4x8x40xbf16, #tpu.memory_space<vmem>>, vector<1x1x8x8xbf16>,
    %67 = vector.extract_strided_slice %51 {offsets = [0, 8], sizes = [8, 8], strides = [1, 1]} : vector<8x32xf32> to vector<8x8xf32>
    %68 = arith.mulf %67, %2 : vector<8x8xf32>
    %69 = vector.extract_strided_slice %52 {offsets = [0, 8], sizes = [8, 8], strides = [1, 1]} : vector<8x32xf32> to vector<8x8xf32>
    %70 = arith.mulf %69, %3 : vector<8x8xf32>
    %71 = arith.addf %68, %70 : vector<8x8xf32>
    %72 = vector.extract_strided_slice %50 {offsets = [0, 32], sizes = [8, 32], strides = [1, 1]} : vector<8x128xf32> to vector<8x32xf32>
    %73 = arith.truncf %72 : vector<8x32xf32> to vector<8x32xbf16>
    %c0_34 = arith.constant 0 : index
    %c1 = arith.constant 1 : index
    %c0_35 = arith.constant 0 : index
    %c0_36 = arith.constant 0 : index
    %74 = vector.load %arg9[%c0_34, %c1, %c0_35, %c0_36] : memref<1x4x8x40xbf16, #tpu.memory_space<vmem>>, vector<1x1x8x32xbf16>
    %75 = vector.shape_cast %74 : vector<1x1x8x32xbf16> to vector<8x32xbf16>
    %76 = vector.shape_cast %73 : vector<8x32xbf16> to vector<1x1x8x32xbf16>
    tpu.vector_store %arg9[%c0_34, %c1, %c0_35, %c0_36], %76 {strides = array<i32>} : memref<1x4x8x40xbf16, #tpu.memory_space<vmem>>, vector<1x1x8x32xbf16>,
    %77 = arith.truncf %71 : vector<8x8xf32> to vector<8x8xbf16>
    %c0_37 = arith.constant 0 : index
    %c1_38 = arith.constant 1 : index
    %c0_39 = arith.constant 0 : index
    %c32_40 = arith.constant 32 : index
    %78 = vector.load %arg9[%c0_37, %c1_38, %c0_39, %c32_40] : memref<1x4x8x40xbf16, #tpu.memory_space<vmem>>, vector<1x1x8x8xbf16>
    %79 = vector.shape_cast %78 : vector<1x1x8x8xbf16> to vector<8x8xbf16>
    %80 = vector.shape_cast %77 : vector<8x8xbf16> to vector<1x1x8x8xbf16>
    tpu.vector_store %arg9[%c0_37, %c1_38, %c0_39, %c32_40], %80 {strides = array<i32>} : memref<1x4x8x40xbf16, #tpu.memory_space<vmem>>, vector<1x1x8x8xbf16>,
    %81 = vector.extract_strided_slice %51 {offsets = [0, 16], sizes = [8, 8], strides = [1, 1]} : vector<8x32xf32> to vector<8x8xf32>
    %82 = arith.mulf %81, %2 : vector<8x8xf32>
    %83 = vector.extract_strided_slice %52 {offsets = [0, 16], sizes = [8, 8], strides = [1, 1]} : vector<8x32xf32> to vector<8x8xf32>
    %84 = arith.mulf %83, %3 : vector<8x8xf32>
    %85 = arith.addf %82, %84 : vector<8x8xf32>
    %86 = vector.extract_strided_slice %50 {offsets = [0, 64], sizes = [8, 32], strides = [1, 1]} : vector<8x128xf32> to vector<8x32xf32>
    %87 = arith.truncf %86 : vector<8x32xf32> to vector<8x32xbf16>
    %c0_41 = arith.constant 0 : index
    %c2 = arith.constant 2 : index
    %c0_42 = arith.constant 0 : index
    %c0_43 = arith.constant 0 : index
    %88 = vector.load %arg9[%c0_41, %c2, %c0_42, %c0_43] : memref<1x4x8x40xbf16, #tpu.memory_space<vmem>>, vector<1x1x8x32xbf16>
    %89 = vector.shape_cast %88 : vector<1x1x8x32xbf16> to vector<8x32xbf16>
    %90 = vector.shape_cast %87 : vector<8x32xbf16> to vector<1x1x8x32xbf16>
    tpu.vector_store %arg9[%c0_41, %c2, %c0_42, %c0_43], %90 {strides = array<i32>} : memref<1x4x8x40xbf16, #tpu.memory_space<vmem>>, vector<1x1x8x32xbf16>,
    %91 = arith.truncf %85 : vector<8x8xf32> to vector<8x8xbf16>
    %c0_44 = arith.constant 0 : index
    %c2_45 = arith.constant 2 : index
    %c0_46 = arith.constant 0 : index
    %c32_47 = arith.constant 32 : index
    %92 = vector.load %arg9[%c0_44, %c2_45, %c0_46, %c32_47] : memref<1x4x8x40xbf16, #tpu.memory_space<vmem>>, vector<1x1x8x8xbf16>
    %93 = vector.shape_cast %92 : vector<1x1x8x8xbf16> to vector<8x8xbf16>
    %94 = vector.shape_cast %91 : vector<8x8xbf16> to vector<1x1x8x8xbf16>
    tpu.vector_store %arg9[%c0_44, %c2_45, %c0_46, %c32_47], %94 {strides = array<i32>} : memref<1x4x8x40xbf16, #tpu.memory_space<vmem>>, vector<1x1x8x8xbf16>,
    %95 = vector.extract_strided_slice %51 {offsets = [0, 24], sizes = [8, 8], strides = [1, 1]} : vector<8x32xf32> to vector<8x8xf32>
    %96 = arith.mulf %95, %2 : vector<8x8xf32>
    %97 = vector.extract_strided_slice %52 {offsets = [0, 24], sizes = [8, 8], strides = [1, 1]} : vector<8x32xf32> to vector<8x8xf32>
    %98 = arith.mulf %97, %3 : vector<8x8xf32>
    %99 = arith.addf %96, %98 : vector<8x8xf32>
    %100 = vector.extract_strided_slice %50 {offsets = [0, 96], sizes = [8, 32], strides = [1, 1]} : vector<8x128xf32> to vector<8x32xf32>
    %101 = arith.truncf %100 : vector<8x32xf32> to vector<8x32xbf16>
    %c0_48 = arith.constant 0 : index
    %c3 = arith.constant 3 : index
    %c0_49 = arith.constant 0 : index
    %c0_50 = arith.constant 0 : index
    %102 = vector.load %arg9[%c0_48, %c3, %c0_49, %c0_50] : memref<1x4x8x40xbf16, #tpu.memory_space<vmem>>, vector<1x1x8x32xbf16>
    %103 = vector.shape_cast %102 : vector<1x1x8x32xbf16> to vector<8x32xbf16>
    %104 = vector.shape_cast %101 : vector<8x32xbf16> to vector<1x1x8x32xbf16>
    tpu.vector_store %arg9[%c0_48, %c3, %c0_49, %c0_50], %104 {strides = array<i32>} : memref<1x4x8x40xbf16, #tpu.memory_space<vmem>>, vector<1x1x8x32xbf16>,
    %105 = arith.truncf %99 : vector<8x8xf32> to vector<8x8xbf16>
    %c0_51 = arith.constant 0 : index
    %c3_52 = arith.constant 3 : index
    %c0_53 = arith.constant 0 : index
    %c32_54 = arith.constant 32 : index
    %106 = vector.load %arg9[%c0_51, %c3_52, %c0_53, %c32_54] : memref<1x4x8x40xbf16, #tpu.memory_space<vmem>>, vector<1x1x8x8xbf16>
    %107 = vector.shape_cast %106 : vector<1x1x8x8xbf16> to vector<8x8xbf16>
    %108 = vector.shape_cast %105 : vector<8x8xbf16> to vector<1x1x8x8xbf16>
    tpu.vector_store %arg9[%c0_51, %c3_52, %c0_53, %c32_54], %108 {strides = array<i32>} : memref<1x4x8x40xbf16, #tpu.memory_space<vmem>>, vector<1x1x8x8xbf16>,
    return
  }
  func.func @transform_0(%arg0: i32, %arg1: i32) -> (i32, i32, i32) {
    %c0_i32 = arith.constant 0 : i32
    %c0_i32_0 = arith.constant 0 : i32
    return %arg0, %arg1, %c0_i32 : i32, i32, i32
  }
  func.func @transform_1(%arg0: i32, %arg1: i32) -> (i32, i32) {
    %c0_i32 = arith.constant 0 : i32
    %c0_i32_0 = arith.constant 0 : i32
    %c0_i32_1 = arith.constant 0 : i32
    return %c0_i32, %c0_i32_0 : i32, i32
  }
  func.func @transform_2(%arg0: i32, %arg1: i32) -> (i32, i32) {
    %c0_i32 = arith.constant 0 : i32
    %c0_i32_0 = arith.constant 0 : i32
    %c0_i32_1 = arith.constant 0 : i32
    return %c0_i32, %c0_i32_0 : i32, i32
  }
  func.func @transform_3(%arg0: i32, %arg1: i32) -> (i32, i32) {
    %c0_i32 = arith.constant 0 : i32
    %c0_i32_0 = arith.constant 0 : i32
    %c0_i32_1 = arith.constant 0 : i32
    return %c0_i32, %c0_i32_0 : i32, i32
  }
  func.func @transform_4(%arg0: i32, %arg1: i32) -> (i32, i32) {
    %c0_i32 = arith.constant 0 : i32
    %c0_i32_0 = arith.constant 0 : i32
    %c0_i32_1 = arith.constant 0 : i32
    return %c0_i32, %c0_i32_0 : i32, i32
  }
  func.func @transform_5(%arg0: i32, %arg1: i32) -> (i32, i32) {
    %c0_i32 = arith.constant 0 : i32
    %c0_i32_0 = arith.constant 0 : i32
    return %arg1, %c0_i32 : i32, i32
  }
  func.func @transform_6(%arg0: i32, %arg1: i32) -> (i32, i32) {
    %c0_i32 = arith.constant 0 : i32
    %c0_i32_0 = arith.constant 0 : i32
    return %arg1, %c0_i32 : i32, i32
  }
  func.func @transform_7(%arg0: i32, %arg1: i32) -> (i32, i32, i32, i32) {
    %c0_i32 = arith.constant 0 : i32
    %c0_i32_0 = arith.constant 0 : i32
    %c0_i32_1 = arith.constant 0 : i32
    return %arg0, %c0_i32, %arg1, %c0_i32_0 : i32, i32, i32, i32
  }
  func.func @transform_8(%arg0: i32, %arg1: i32) -> (i32, i32, i32) {
    %c0_i32 = arith.constant 0 : i32
    %c0_i32_0 = arith.constant 0 : i32
    return %arg0, %arg1, %c0_i32 : i32, i32, i32
  }
}

</mosaic_0001>

<llo_original>
// kernel: tpu_custom_call.1
$region0: #{tpu_custom_call.1}
  #allocation0 [shape = 'u32[]', space=smem, size = 0x4, offset = 0x4, fixed_abs, tag = 'smem constant byte address 0x4 - core index']
  #allocation1 [shape = 'u32[144,128]{1,0:T(1,128)}', space=vmem, size = 0x12000, scoped, tag = 'internal scratch']
  %s0 = inlined_call_operand.hbm [shape: bf16[2,8,32], index: 0, kind: input, shape index: {}]
  %s1 = inlined_call_operand.hbm [shape: bf16[32,80], index: 1, kind: input, shape index: {}]
  %s2 = inlined_call_operand.hbm [shape: bf16[32,192], index: 2, kind: input, shape index: {}]
  %s3 = inlined_call_operand.vmem [shape: f32[1,32], index: 3, kind: input, shape index: {}]
  %s4 = inlined_call_operand.vmem [shape: f32[1,32], index: 4, kind: input, shape index: {}]
  %s5 = inlined_call_operand.vmem [shape: f32[8,8], index: 5, kind: input, shape index: {}]
  %s6 = inlined_call_operand.vmem [shape: f32[8,8], index: 6, kind: input, shape index: {}]
  %s7 = inlined_call_operand.hbm [shape: bf16[2,4,8,40], index: 7, kind: output, shape index: {0}]
  %s8 = inlined_call_operand.hbm [shape: bf16[2,8,40], index: 8, kind: output, shape index: {1}]
  %9 = xla_tuple %s7, %s8
  %s10 = sld [smem:[#allocation0]]
  $region81: #{tpu_custom_call.1} parent=0
    _
  %s12 = ssub.s32 1, %s10
  %s13 = scalar_select 0, %s12, %s10
  $region1: #{tpu_custom_call.1} parent=0
    #allocation2 [shape = 'u8[4096]{0}', space=vmem, size = 0x1000, scoped, tag = 'input window, operand 0']
    #allocation3 [shape = 's32[2]{0}', space=sflag, size = 0x8, scoped, tag = 'scoped memory for tpu_custom_call.1']
    #allocation4 [shape = 's32[2]{0}', space=sflag, size = 0x8, scoped, tag = 'scoped memory for tpu_custom_call.1']
    #allocation5 [shape = 'u8[8192]{0}', space=vmem, size = 0x2000, scoped, tag = 'input window, operand 1, single buffered']
    #allocation6 [shape = 's32[1]{0}', space=sflag, size = 0x4, scoped, tag = 'scoped memory for tpu_custom_call.1']
    #allocation7 [shape = 'u8[16384]{0}', space=vmem, size = 0x4000, scoped, tag = 'input window, operand 2, single buffered']
    #allocation8 [shape = 'u8[16384]{0}', space=vmem, size = 0x4000, scoped, tag = 'output window, operand 0']
    #allocation9 [shape = 'u8[4096]{0}', space=vmem, size = 0x1000, scoped, tag = 'output window, operand 1']
    #allocation10 [shape = 's32[2]{0}', space=sflag, size = 0x8, scoped, tag = 'scoped memory for tpu_custom_call.1']
    %14 = vsyncpa [#allocation3], 0
    %s15 = scalar_lea.sflag [#allocation3], 1
    %16 = vsyncpa %s15, 0
    %17 = vsyncpa [#allocation6], 0
    %18 = vsyncpa [#allocation4], 0
    %s19 = scalar_lea.sflag [#allocation4], 1
    %20 = vsyncpa %s19, 0
    %21 = vsyncpa [#allocation10], 0
    %s22 = scalar_lea.sflag [#allocation10], 1
    %23 = vsyncpa %s22, 0
    loop: start=0, step=1, limit=4
    $region2: #{tpu_custom_call.1} parent=1 // loop_pre_header
      _
    $region3: #{tpu_custom_call.1} parent=1 // loop_header
      %s25 = sphi 0, %s29
      %p26 = scmp.ge.s32.totalorder %s25, 4
      %s32 = sphi 0, %s44
      %s33 = sphi 0, %s40
      %s34 = sphi 0, %s32
      %s35 = sphi 0, %s33
      %s36 = sphi 0, %s34
      %s37 = sphi 0, %s35
      %s49 = sphi 0, %s51
      %s52 = sphi 0, %s49
      %s53 = sphi 0, %s52
      %s69 = sphi 0, %s53
      %s73 = sphi 0, %s73
      %s75 = sphi 0, %s73
      %s76 = sphi 0, %s75
      %s90 = sphi 0, %s76
      %s94 = sphi 0, %s94
      %s96 = sphi 0, %s94
      %s97 = sphi 0, %s96
      %s111 = sphi 0, %s97
      %s115 = sphi 0, %s115
      %s117 = sphi 0, %s115
      %s118 = sphi 0, %s117
      %s132 = sphi 0, %s118
      %s136 = sphi 0, %s136
      %s138 = sphi 0, %s136
      %s139 = sphi 0, %s138
      %s153 = sphi 0, %s139
      %s159 = sphi 0, %s161
      %s162 = sphi 0, %s159
      %s163 = sphi 0, %s162
      %s179 = sphi 0, %s163
      %s185 = sphi 0, %s187
      %s188 = sphi 0, %s185
      %s189 = sphi 0, %s188
      %s205 = sphi 0, %s189
      %s213 = sphi 0, %s215
      %s216 = sphi 0, %s213
      %s217 = sphi 0, %s216
      %s233 = sphi 0, %s217
      %s241 = sphi 0, %s243
      %s244 = sphi 0, %s241
      %s245 = sphi 0, %s244
      %s261 = sphi 0, %s245
    $region4: #{tpu_custom_call.1} parent=1 // loop_header_branch
      %28 = sbr.rel (%p26) target = $region8
    $region5: #{tpu_custom_call.1} parent=1 // loop_body
      %s30 = ssub.s32 %s25, 1
      %s31 = ssub.s32 %s25, 2
      %s38 = sadd.s32 1, %s33
      %p39 = scmp.ge.s32.totalorder %s38, 1
      %s40 = scalar_select %p39, 0, %s38
      %s41 = sadd.s32 1, %s32
      %s42 = scalar_select %p39, %s41, %s32
      %p43 = scmp.ge.s32.totalorder %s42, 2
      %s44 = scalar_select %p43, 0, %s42
      %s45 = ssub.s32 %s32, %s44
      %s46 = ssub.s32 %s33, %s40
      %s47 = sor.u32 %s45, %s46
      %p48 = scmp.eq.s32.totalorder %s47, 0
      %s50 = sadd.s32 %s49, 1
      %s51 = scalar_select %p48, %s49, %s50
      %p54 = pneg %p48
      %p55 = scmp.eq.s32.totalorder %s25, 1
      %p56 = por %p54, %p55
      %p57 = scmp.ne.s32.totalorder %s49, %s52
      %p58 = scmp.eq.s32.totalorder %s25, 0
      %p59 = por %p57, %p58
      %p60 = scmp.ne.s32.totalorder %s49, %s52
      %p61 = scmp.eq.s32.totalorder %s30, 1
      %p62 = por %p60, %p61
      %p63 = scmp.ne.s32.totalorder %s52, %s53
      %p64 = scmp.eq.s32.totalorder %s30, 0
      %p65 = por %p63, %p64
      %p66 = scmp.ne.s32.totalorder %s52, %s53
      %p67 = scmp.eq.s32.totalorder %s31, 1
      %p68 = por %p66, %p67
      %p70 = scmp.ne.s32.totalorder %s53, %s69
      %p71 = scmp.eq.s32.totalorder %s31, 0
      %p72 = por %p70, %p71
      %s74 = sadd.s32 %s73, 1
      %p77 = scmp.eq.s32.totalorder %s25, 1
      %p78 = scmp.ne.s32.totalorder %s73, %s75
      %p79 = scmp.eq.s32.totalorder %s25, 0
      %p80 = por %p78, %p79
      %p81 = scmp.ne.s32.totalorder %s73, %s75
      %p82 = scmp.eq.s32.totalorder %s30, 1
      %p83 = por %p81, %p82
      %p84 = scmp.ne.s32.totalorder %s75, %s76
      %p85 = scmp.eq.s32.totalorder %s30, 0
      %p86 = por %p84, %p85
      %p87 = scmp.ne.s32.totalorder %s75, %s76
      %p88 = scmp.eq.s32.totalorder %s31, 1
      %p89 = por %p87, %p88
      %p91 = scmp.ne.s32.totalorder %s76, %s90
      %p92 = scmp.eq.s32.totalorder %s31, 0
      %p93 = por %p91, %p92
      %s95 = sadd.s32 %s94, 1
      %p98 = scmp.eq.s32.totalorder %s25, 1
      %p99 = scmp.ne.s32.totalorder %s94, %s96
      %p100 = scmp.eq.s32.totalorder %s25, 0
      %p101 = por %p99, %p100
      %p102 = scmp.ne.s32.totalorder %s94, %s96
      %p103 = scmp.eq.s32.totalorder %s30, 1
      %p104 = por %p102, %p103
      %p105 = scmp.ne.s32.totalorder %s96, %s97
      %p106 = scmp.eq.s32.totalorder %s30, 0
      %p107 = por %p105, %p106
      %p108 = scmp.ne.s32.totalorder %s96, %s97
      %p109 = scmp.eq.s32.totalorder %s31, 1
      %p110 = por %p108, %p109
      %p112 = scmp.ne.s32.totalorder %s97, %s111
      %p113 = scmp.eq.s32.totalorder %s31, 0
      %p114 = por %p112, %p113
      %s116 = sadd.s32 %s115, 1
      %p119 = scmp.eq.s32.totalorder %s25, 1
      %p120 = scmp.ne.s32.totalorder %s115, %s117
      %p121 = scmp.eq.s32.totalorder %s25, 0
      %p122 = por %p120, %p121
      %p123 = scmp.ne.s32.totalorder %s115, %s117
      %p124 = scmp.eq.s32.totalorder %s30, 1
      %p125 = por %p123, %p124
      %p126 = scmp.ne.s32.totalorder %s117, %s118
      %p127 = scmp.eq.s32.totalorder %s30, 0
      %p128 = por %p126, %p127
      %p129 = scmp.ne.s32.totalorder %s117, %s118
      %p130 = scmp.eq.s32.totalorder %s31, 1
      %p131 = por %p129, %p130
      %p133 = scmp.ne.s32.totalorder %s118, %s132
      %p134 = scmp.eq.s32.totalorder %s31, 0
      %p135 = por %p133, %p134
      %s137 = sadd.s32 %s136, 1
      %p140 = scmp.eq.s32.totalorder %s25, 1
      %p141 = scmp.ne.s32.totalorder %s136, %s138
      %p142 = scmp.eq.s32.totalorder %s25, 0
      %p143 = por %p141, %p142
      %p144 = scmp.ne.s32.totalorder %s136, %s138
      %p145 = scmp.eq.s32.totalorder %s30, 1
      %p146 = por %p144, %p145
      %p147 = scmp.ne.s32.totalorder %s138, %s139
      %p148 = scmp.eq.s32.totalorder %s30, 0
      %p149 = por %p147, %p148
      %p150 = scmp.ne.s32.totalorder %s138, %s139
      %p151 = scmp.eq.s32.totalorder %s31, 1
      %p152 = por %p150, %p151
      %p154 = scmp.ne.s32.totalorder %s139, %s153
      %p155 = scmp.eq.s32.totalorder %s31, 0
      %p156 = por %p154, %p155
      %s157 = ssub.s32 %s33, %s40
      %p158 = scmp.eq.s32.totalorder %s157, 0
      %s160 = sadd.s32 %s159, 1
      %s161 = scalar_select %p158, %s159, %s160
      %p164 = pneg %p158
      %p165 = scmp.eq.s32.totalorder %s25, 1
      %p166 = por %p164, %p165
      %p167 = scmp.ne.s32.totalorder %s159, %s162
      %p168 = scmp.eq.s32.totalorder %s25, 0
      %p169 = por %p167, %p168
      %p170 = scmp.ne.s32.totalorder %s159, %s162
      %p171 = scmp.eq.s32.totalorder %s30, 1
      %p172 = por %p170, %p171
      %p173 = scmp.ne.s32.totalorder %s162, %s163
      %p174 = scmp.eq.s32.totalorder %s30, 0
      %p175 = por %p173, %p174
      %p176 = scmp.ne.s32.totalorder %s162, %s163
      %p177 = scmp.eq.s32.totalorder %s31, 1
      %p178 = por %p176, %p177
      %p180 = scmp.ne.s32.totalorder %s163, %s179
      %p181 = scmp.eq.s32.totalorder %s31, 0
      %p182 = por %p180, %p181
      %s183 = ssub.s32 %s33, %s40
      %p184 = scmp.eq.s32.totalorder %s183, 0
      %s186 = sadd.s32 %s185, 1
      %s187 = scalar_select %p184, %s185, %s186
      %p190 = pneg %p184
      %p191 = scmp.eq.s32.totalorder %s25, 1
      %p192 = por %p190, %p191
      %p193 = scmp.ne.s32.totalorder %s185, %s188
      %p194 = scmp.eq.s32.totalorder %s25, 0
      %p195 = por %p193, %p194
      %p196 = scmp.ne.s32.totalorder %s185, %s188
      %p197 = scmp.eq.s32.totalorder %s30, 1
      %p198 = por %p196, %p197
      %p199 = scmp.ne.s32.totalorder %s188, %s189
      %p200 = scmp.eq.s32.totalorder %s30, 0
      %p201 = por %p199, %p200
      %p202 = scmp.ne.s32.totalorder %s188, %s189
      %p203 = scmp.eq.s32.totalorder %s31, 1
      %p204 = por %p202, %p203
      %p206 = scmp.ne.s32.totalorder %s189, %s205
      %p207 = scmp.eq.s32.totalorder %s31, 0
      %p208 = por %p206, %p207
      %s209 = ssub.s32 %s32, %s44
      %s210 = ssub.s32 %s33, %s40
      %s211 = sor.u32 %s209, %s210
      %p212 = scmp.eq.s32.totalorder %s211, 0
      %s214 = sadd.s32 %s213, 1
      %s215 = scalar_select %p212, %s213, %s214
      %p218 = pneg %p212
      %p219 = scmp.eq.s32.totalorder %s25, 1
      %p220 = por %p218, %p219
      %p221 = scmp.ne.s32.totalorder %s213, %s216
      %p222 = scmp.eq.s32.totalorder %s25, 0
      %p223 = por %p221, %p222
      %p224 = scmp.ne.s32.totalorder %s213, %s216
      %p225 = scmp.eq.s32.totalorder %s30, 1
      %p226 = por %p224, %p225
      %p227 = scmp.ne.s32.totalorder %s216, %s217
      %p228 = scmp.eq.s32.totalorder %s30, 0
      %p229 = por %p227, %p228
      %p230 = scmp.ne.s32.totalorder %s216, %s217
      %p231 = scmp.eq.s32.totalorder %s31, 1
      %p232 = por %p230, %p231
      %p234 = scmp.ne.s32.totalorder %s217, %s233
      %p235 = scmp.eq.s32.totalorder %s31, 0
      %p236 = por %p234, %p235
      %s237 = ssub.s32 %s32, %s44
      %s238 = ssub.s32 %s33, %s40
      %s239 = sor.u32 %s237, %s238
      %p240 = scmp.eq.s32.totalorder %s239, 0
      %s242 = sadd.s32 %s241, 1
      %s243 = scalar_select %p240, %s241, %s242
      %p246 = pneg %p240
      %p247 = scmp.eq.s32.totalorder %s25, 1
      %p248 = por %p246, %p247
      %p249 = scmp.ne.s32.totalorder %s241, %s244
      %p250 = scmp.eq.s32.totalorder %s25, 0
      %p251 = por %p249, %p250
      %p252 = scmp.ne.s32.totalorder %s241, %s244
      %p253 = scmp.eq.s32.totalorder %s30, 1
      %p254 = por %p252, %p253
      %p255 = scmp.ne.s32.totalorder %s244, %s245
      %p256 = scmp.eq.s32.totalorder %s30, 0
      %p257 = por %p255, %p256
      %p258 = scmp.ne.s32.totalorder %s244, %s245
      %p259 = scmp.eq.s32.totalorder %s31, 1
      %p260 = por %p258, %p259
      %p262 = scmp.ne.s32.totalorder %s245, %s261
      %p263 = scmp.eq.s32.totalorder %s31, 0
      %p264 = por %p262, %p263
      %p265 = scmp.le.s32.totalorder 1, %s25
      %p266 = scmp.lt.s32.totalorder %s25, 3
      %p267 = pnand %p265, %p266
      %p268 = pneg %p267
      // Predicated region
      $region9: #{tpu_custom_call.1} parent=5 // pred_check
        _
      $region10: #{tpu_custom_call.1} parent=5 // pred_check_branch
        %270 = sbr.rel (%p267) target = $region12
      $region11: #{tpu_custom_call.1} parent=5 // pred_region
        %s271 = ssub.s32 %s25, 1
        // Predicated region
        $region13: #{tpu_custom_call.1} parent=11 // pred_check
          %p272 = pneg %p86
        $region14: #{tpu_custom_call.1} parent=11 // pred_check_branch
          %274 = sbr.rel (%p272) target = $region16
        $region15: #{tpu_custom_call.1} parent=11 // pred_region
          %s276 = ssub.s32 256, 256
          %277 = vsyncadd [#allocation6], %s276
          %s278 = sshll.u32 [#allocation5], 4
          %s279 = int_to_ptr.vmem [resolvable:$true] %s278
          %284 = dma.hbm_to_vmem [thread:$0]  %s1, 256, %s279, [#allocation6], 64, 64, 4
        $region16: #{tpu_custom_call.1} parent=11 // pred_fallthru
          _
        // Predicated region
        $region17: #{tpu_custom_call.1} parent=11 // pred_check
          %p285 = pneg %p107
        $region18: #{tpu_custom_call.1} parent=11 // pred_check_branch
          %287 = sbr.rel (%p285) target = $region20
        $region19: #{tpu_custom_call.1} parent=11 // pred_region
          %s289 = ssub.s32 512, 512
          %290 = vsyncadd [#allocation6], %s289
          %s291 = sshll.u32 [#allocation7], 4
          %s292 = int_to_ptr.vmem [resolvable:$true] %s291
          %297 = dma.hbm_to_vmem [thread:$0]  %s2, 512, %s292, [#allocation6], 128, 128, 8
        $region20: #{tpu_custom_call.1} parent=11 // pred_fallthru
          _
        // Predicated region
        $region21: #{tpu_custom_call.1} parent=11 // pred_check
          %p298 = pneg %p128
        $region22: #{tpu_custom_call.1} parent=11 // pred_check_branch
          %300 = sbr.rel (%p298) target = $region24
        $region23: #{tpu_custom_call.1} parent=11 // pred_region
          _
        $region24: #{tpu_custom_call.1} parent=11 // pred_fallthru
          _
        // Predicated region
        $region25: #{tpu_custom_call.1} parent=11 // pred_check
          %p301 = pneg %p149
        $region26: #{tpu_custom_call.1} parent=11 // pred_check_branch
          %303 = sbr.rel (%p301) target = $region28
        $region27: #{tpu_custom_call.1} parent=11 // pred_region
          _
        $region28: #{tpu_custom_call.1} parent=11 // pred_fallthru
          _
        // Predicated region
        $region29: #{tpu_custom_call.1} parent=11 // pred_check
          %p304 = pneg %p175
        $region30: #{tpu_custom_call.1} parent=11 // pred_check_branch
          %306 = sbr.rel (%p304) target = $region32
        $region31: #{tpu_custom_call.1} parent=11 // pred_region
          %p307 = scmp.lt.s32.totalorder %s35, 0
          %s308 = scalar_select %p307, %s35, 0
          %s309 = smul.addr %s308, 8
          %s310 = scalar_lea.vmem %s5, %s309
        $region32: #{tpu_custom_call.1} parent=11 // pred_fallthru
          _
        // Predicated region
        $region33: #{tpu_custom_call.1} parent=11 // pred_check
          %p311 = pneg %p201
        $region34: #{tpu_custom_call.1} parent=11 // pred_check_branch
          %313 = sbr.rel (%p311) target = $region36
        $region35: #{tpu_custom_call.1} parent=11 // pred_region
          %p314 = scmp.lt.s32.totalorder %s35, 0
          %s315 = scalar_select %p314, %s35, 0
          %s316 = smul.addr %s315, 8
          %s317 = scalar_lea.vmem %s6, %s316
        $region36: #{tpu_custom_call.1} parent=11 // pred_fallthru
          _
      $region12: #{tpu_custom_call.1} parent=5 // pred_fallthru
        _
      %p318 = scmp.lt.s32.totalorder %s25, 2
      // Predicated region
      $region37: #{tpu_custom_call.1} parent=5 // pred_check
        %p319 = pneg %p318
      $region38: #{tpu_custom_call.1} parent=5 // pred_check_branch
        %321 = sbr.rel (%p319) target = $region40
      $region39: #{tpu_custom_call.1} parent=5 // pred_region
        // Predicated region
        $region41: #{tpu_custom_call.1} parent=39 // pred_check
          %p322 = pneg %p59
        $region42: #{tpu_custom_call.1} parent=39 // pred_check_branch
          %324 = sbr.rel (%p322) target = $region44
        $region43: #{tpu_custom_call.1} parent=39 // pred_region
          %s325 = sand.u32 %s49, 1
          %s326 = scalar_lea.sflag [#allocation3], %s325
          %s327 = sand.u32 %s49, 1
          %s328 = smul.addr %s327, 4
          %s329 = scalar_lea.vmem [#allocation2], %s328
          %s331 = ssub.s32 64, 64
          %332 = vsyncadd %s326, %s331
          %s333 = sadd.s32 %s33, %s32
          %s334 = smul.addr %s333, 64
          %s335 = scalar_lea.hbm %s0, %s334
          %s337 = sshll.u32 %s329, 4
          %s338 = int_to_ptr.vmem [resolvable:$true] %s337
          %340 = dma.hbm_to_vmem [thread:$0]  %s335, 64, %s338, %s326
        $region44: #{tpu_custom_call.1} parent=39 // pred_fallthru
          _
      $region40: #{tpu_custom_call.1} parent=5 // pred_fallthru
        _
      %p341 = scmp.le.s32.totalorder 1, %s25
      %p342 = scmp.lt.s32.totalorder %s25, 3
      %p343 = pnand %p341, %p342
      %p344 = pneg %p343
      // Predicated region
      $region45: #{tpu_custom_call.1} parent=5 // pred_check
        _
      $region46: #{tpu_custom_call.1} parent=5 // pred_check_branch
        %346 = sbr.rel (%p343) target = $region48
      $region47: #{tpu_custom_call.1} parent=5 // pred_region
        %s347 = ssub.s32 %s25, 1
        %s348 = sand.u32 %s52, 1
        %s349 = scalar_lea.sflag [#allocation3], %s348
        %s350 = sand.u32 %s52, 1
        %s351 = smul.addr %s350, 4
        %s352 = scalar_lea.vmem [#allocation2], %s351
        // Predicated region
        $region49: #{tpu_custom_call.1} parent=47 // pred_check
          %p353 = pneg %p65
        $region50: #{tpu_custom_call.1} parent=47 // pred_check_branch
          %355 = sbr.rel (%p353) target = $region52
        $region51: #{tpu_custom_call.1} parent=47 // pred_region
          %356 = dma.done %s349, 64
        $region52: #{tpu_custom_call.1} parent=47 // pred_fallthru
          _
        // Predicated region
        $region53: #{tpu_custom_call.1} parent=47 // pred_check
          %p357 = pneg %p86
        $region54: #{tpu_custom_call.1} parent=47 // pred_check_branch
          %359 = sbr.rel (%p357) target = $region56
        $region55: #{tpu_custom_call.1} parent=47 // pred_region
          %360 = dma.done [#allocation6], 256
        $region56: #{tpu_custom_call.1} parent=47 // pred_fallthru
          _
        // Predicated region
        $region57: #{tpu_custom_call.1} parent=47 // pred_check
          %p361 = pneg %p107
        $region58: #{tpu_custom_call.1} parent=47 // pred_check_branch
          %363 = sbr.rel (%p361) target = $region60
        $region59: #{tpu_custom_call.1} parent=47 // pred_region
          %364 = dma.done [#allocation6], 512
        $region60: #{tpu_custom_call.1} parent=47 // pred_fallthru
          _
        %s365 = sand.u32 %s52, 1
        %s366 = scalar_lea.sflag [#allocation3], %s365
        %s367 = sand.u32 %s52, 1
        %s368 = smul.addr %s367, 4
        %s369 = scalar_lea.vmem [#allocation2], %s368
        %p370 = pneg %p65
        %p371 = pneg %p62
        %p372 = pneg %p86
        %p373 = pneg %p83
        %p374 = pneg %p107
        %p375 = pneg %p104
        %p376 = pneg %p128
        %p377 = pneg %p125
        %p378 = pneg %p149
        %p379 = pneg %p146
        %p380 = scmp.lt.s32.totalorder %s35, 0
        %s381 = scalar_select %p380, %s35, 0
        %s382 = smul.addr %s381, 8
        %s383 = scalar_lea.vmem %s5, %s382
        %p384 = pneg %p175
        %p385 = pneg %p172
        %p386 = scmp.lt.s32.totalorder %s35, 0
        %s387 = scalar_select %p386, %s35, 0
        %s388 = smul.addr %s387, 8
        %s389 = scalar_lea.vmem %s6, %s388
        %p390 = pneg %p201
        %p391 = pneg %p198
        %p392 = pneg %p229
        %p393 = pneg %p226
        %s394 = sand.u32 %s216, 1
        %s395 = scalar_lea.sflag [#allocation4], %s394
        %s396 = sand.u32 %s216, 1
        %s397 = smul.addr %s396, 16
        %s398 = scalar_lea.vmem [#allocation8], %s397
        %p399 = pneg %p257
        %p400 = pneg %p254
        %s401 = sand.u32 %s244, 1
        %s402 = scalar_lea.sflag [#allocation10], %s401
        %s403 = sand.u32 %s244, 1
        %s404 = smul.addr %s403, 4
        %s405 = scalar_lea.vmem [#allocation9], %s404
        %p406 = scmp.lt.s32.totalorder %s35, 0
        %s407 = scalar_select %p406, %s35, 0
        %s408 = smul.addr %s407, 8
        %s409 = scalar_lea.vmem %s5, %s408
        %p410 = scmp.lt.s32.totalorder %s35, 0
        %s411 = scalar_select %p410, %s35, 0
        %s412 = smul.addr %s411, 8
        %s413 = scalar_lea.vmem %s6, %s412
        %v415 = vld [vmem:[%s352] sm:$0xf]
        %v416 = vld [vmem:[%s409] sm:$0xff]
        %v417 = vld [vmem:[%s413] sm:$0xff]
        %v418 = vld [vmem:[#allocation5] sm:$0xf]
        %v419 = vld [vmem:[#allocation5 + $0x4] sm:$0xf]
        %v420 = vld [vmem:[#allocation5 + $0x8] sm:$0xf]
        %v421 = vld [vmem:[#allocation5 + $0xc] sm:$0xf]
        %v426 = vunpack.c.l.b16 %v418
        %v427 = vunpack.c.l.b16 %v419
        %v428 = vunpack.c.l.b16 %v420
        %v429 = vunpack.c.l.b16 %v421
        %v430 = vpack.c.b16 %v427, %v426
        %v431 = vpack.c.b16 %v429, %v428
        %vm434 = vcmask 261120
        %v436 = vsel %vm434, %v415, 0
        %438 = vmatprep.subr.bf16.mxu0 0
        %439 = vmatpush1.bf16.msra.mxu0 %v430
        %440 = vmatprep.subr.bf16.mxu0 0
        %441 = vmatpush1.bf16.msra.mxu0 %v431
        %442 = vmatprep.subr.bf16.mxu0 0
        %443 = vmatpush1.bf16.msra.mxu0 0
        %444 = vmatprep.subr.bf16.mxu0 0
        %445 = vmatpush1.bf16.msra.mxu0 0
        %446 = vmatprep.subr.bf16.mxu0 0
        %447 = vmatpush1.bf16.msra.mxu0 0
        %448 = vmatprep.subr.bf16.mxu0 0
        %449 = vmatpush1.bf16.msra.mxu0 0
        %450 = vmatprep.subr.bf16.mxu0 0
        %451 = vmatpush1.bf16.msra.mxu0 0
        %452 = vmatprep.subr.bf16.mxu0 0
        %453 = vmatpush1.bf16.msra.mxu0 0
        %454 = vmatprep.subr.bf16.mxu0 0
        %455 = vmatpush1.bf16.msra.mxu0 0
        %456 = vmatprep.subr.bf16.mxu0 0
        %457 = vmatpush1.bf16.msra.mxu0 0
        %458 = vmatprep.subr.bf16.mxu0 0
        %459 = vmatpush1.bf16.msra.mxu0 0
        %460 = vmatprep.subr.bf16.mxu0 0
        %461 = vmatpush1.bf16.msra.mxu0 0
        %462 = vmatprep.subr.bf16.mxu0 0
        %463 = vmatpush1.bf16.msra.mxu0 0
        %464 = vmatprep.subr.bf16.mxu0 0
        %465 = vmatpush1.bf16.msra.mxu0 0
        %466 = vmatprep.subr.bf16.mxu0 0
        %467 = vmatpush1.bf16.msra.mxu0 0
        %468 = vmatprep.subr.bf16.mxu0 0
        %469 = vmatpush1.bf16.msra.mxu0 0
        %470 = vmatprep.mubr.bf16.mxu0 0
        %471 = vmatmul.mubr.bf16.gmra.mrb[0].mxu0 %v436
        %v472 = vpop.f32.mrb[0].mxu0
        %v473 = vadd.f32 0.0, %v472
        %v474 = vpop.f32.mrb[0].mxu0
        %v475 = vpop.f32.mrb[0].mxu0
        %v476 = vpop.f32.mrb[0].mxu0
        %477 = vdwg.mxu0
        %v478 = vld [vmem:[%s3] sm:$0x1]
        %v479 = vmul.f32 %v473, %v473
        %v480 = vsel %vm434, %v479, 0.0
        %481 = vadd.xlane.f32.xlu0 %v480
        %v482 = vpop.xlane.xlu0 %481
        %v483 = vrcp.pop 32.0
        %v484 = vmul.f32 %v482, %v483
        %v485 = vadd.f32 %v484, 1e-06
        %v486 = vrsqrt.pop %v485
        %v487 = vmul.f32 %v473, %v486
        %v489 = vlaneseq
        %v490 = vshrl.u32 %v489, 7
        %v491 = vsub.s32 0, %v490
        %v492 = vrot.slane %v478, %v491
        %v494 = vmul.f32 %v487, %v492
        %v495 = vld [vmem:[%s4] sm:$0x1]
        %497 = vrot.lane.b32.xlu0 %v479, 96
        %v498 = vpop.permute.xlu0 %497
        %v500 = vsel %vm434, %v498, 0.0
        %501 = vadd.xlane.f32.xlu0 %v500
        %v502 = vpop.xlane.xlu0 %501
        %v503 = vmul.f32 %v502, %v483
        %v504 = vadd.f32 %v503, 1e-06
        %v505 = vrsqrt.pop %v504
        %v506 = vmul.f32 %v473, %v505
        %v508 = vlaneseq
        %v509 = vshrl.u32 %v508, 7
        %v510 = vsub.s32 0, %v509
        %v511 = vrot.slane %v495, %v510
        %512 = vrot.lane.b32.xlu0 %v511, 32
        %v513 = vpop.permute.xlu0 %512
        %v515 = vmul.f32 %v506, %v513
        %517 = vrot.lane.b32.xlu0 %v416, 64
        %v518 = vpop.permute.xlu0 %517
        %v520 = vmul.f32 %v473, %v518
        %522 = vrot.lane.b32.xlu0 %v417, 72
        %v523 = vpop.permute.xlu0 %522
        %v525 = vmul.f32 %v473, %v523
        %527 = vrot.lane.b32.xlu0 %v525, 120
        %v528 = vpop.permute.xlu0 %527
        %v530 = vadd.f32 %v520, %v528
        %v531 = vpack.c.bf16 %v515, %v515
        %v533 = vunpack.c.l.b16 %v531
        %v534 = vpack.c.b16 %v533, %v533
        %535 = vrot.lane.b32.xlu0 %v534, 96
        %v536 = vpop.permute.xlu0 %535
        %vm538 = vcmask 257024
        %539 = vst.msk [vmem:[%s405] sm:$0xf] %vm538, %v536
        %v540 = vpack.c.bf16 %v530, %v530
        %v542 = vunpack.c.l.b16 %v540
        %v543 = vpack.c.b16 %v542, %v542
        %544 = vrot.lane.b32.xlu0 %v543, 96
        %v545 = vpop.permute.xlu0 %544
        %vm547 = vcmask 322816
        %548 = vst.msk [vmem:[%s405] sm:$0xf] %vm547, %v545
        %v549 = vpack.c.bf16 %v494, %v494
        %v550 = vld [vmem:[#allocation7] sm:$0xff]
        %v551 = vld [vmem:[#allocation7 + $0x8] sm:$0xff]
        %v552 = vld [vmem:[#allocation7 + $0x10] sm:$0xff]
        %v553 = vld [vmem:[#allocation7 + $0x18] sm:$0xff]
        %v558 = vunpack.c.l.b16 %v550
        %v559 = vunpack.c.h.b16 %v550
        %v560 = vunpack.c.l.b16 %v551
        %v561 = vunpack.c.h.b16 %v551
        %v562 = vunpack.c.l.b16 %v552
        %v563 = vunpack.c.h.b16 %v552
        %v564 = vunpack.c.l.b16 %v553
        %v565 = vunpack.c.h.b16 %v553
        %v566 = vpack.c.b16 %v560, %v558
        %v567 = vpack.c.b16 %v561, %v559
        %v568 = vpack.c.b16 %v564, %v562
        %v569 = vpack.c.b16 %v565, %v563
        %v575 = vsel %vm434, %v549, 0
        %577 = vmatprep.subr.bf16.mxu0 %v567
        %578 = vmatpush1.bf16.msra.mxu0 %v566
        %579 = vmatprep.subr.bf16.mxu0 %v569
        %580 = vmatpush1.bf16.msra.mxu0 %v568
        %581 = vmatprep.subr.bf16.mxu0 0
        %582 = vmatpush1.bf16.msra.mxu0 0
        %583 = vmatprep.subr.bf16.mxu0 0
        %584 = vmatpush1.bf16.msra.mxu0 0
        %585 = vmatprep.subr.bf16.mxu0 0
        %586 = vmatpush1.bf16.msra.mxu0 0
        %587 = vmatprep.subr.bf16.mxu0 0
        %588 = vmatpush1.bf16.msra.mxu0 0
        %589 = vmatprep.subr.bf16.mxu0 0
        %590 = vmatpush1.bf16.msra.mxu0 0
        %591 = vmatprep.subr.bf16.mxu0 0
        %592 = vmatpush1.bf16.msra.mxu0 0
        %593 = vmatprep.subr.bf16.mxu0 0
        %594 = vmatpush1.bf16.msra.mxu0 0
        %595 = vmatprep.subr.bf16.mxu0 0
        %596 = vmatpush1.bf16.msra.mxu0 0
        %597 = vmatprep.subr.bf16.mxu0 0
        %598 = vmatpush1.bf16.msra.mxu0 0
        %599 = vmatprep.subr.bf16.mxu0 0
        %600 = vmatpush1.bf16.msra.mxu0 0
        %601 = vmatprep.subr.bf16.mxu0 0
        %602 = vmatpush1.bf16.msra.mxu0 0
        %603 = vmatprep.subr.bf16.mxu0 0
        %604 = vmatpush1.bf16.msra.mxu0 0
        %605 = vmatprep.subr.bf16.mxu0 0
        %606 = vmatpush1.bf16.msra.mxu0 0
        %607 = vmatprep.subr.bf16.mxu0 0
        %608 = vmatpush1.bf16.msra.mxu0 0
        %609 = vmatprep.mubr.bf16.mxu0 0
        %610 = vmatmul.mubr.bf16.gmra.mrb[0].mxu0 %v575
        %v611 = vpop.f32.mrb[0].mxu0
        %v612 = vadd.f32 0.0, %v611
        %v613 = vpop.f32.mrb[0].mxu0
        %v614 = vadd.f32 0.0, %v613
        %v615 = vpop.f32.mrb[0].mxu0
        %v616 = vpop.f32.mrb[0].mxu0
        %617 = vdwg.mxu0
        %v618 = vmul.f32 %v614, %v416
        %619 = vrot.lane.b32.xlu0 %v417, 32
        %v620 = vpop.permute.xlu0 %619
        %v622 = vmul.f32 %v614, %v620
        %624 = vrot.lane.b32.xlu0 %v622, 96
        %v625 = vpop.permute.xlu0 %624
        %v627 = vadd.f32 %v618, %v625
        %v628 = vpack.c.bf16 %v612, %v612
        %629 = vst.msk [vmem:[%s398] sm:$0xf] %vm538, %v628
        %v630 = vpack.c.bf16 %v627, %v627
        %v632 = vunpack.c.l.b16 %v630
        %v633 = vpack.c.b16 %v632, %v632
        %634 = vrot.lane.b32.xlu0 %v633, 32
        %v635 = vpop.permute.xlu0 %634
        %637 = vst.msk [vmem:[%s398] sm:$0xf] %vm547, %v635
        %638 = vrot.lane.b32.xlu0 %v416, 8
        %v639 = vpop.permute.xlu0 %638
        %v641 = vmul.f32 %v614, %v639
        %642 = vrot.lane.b32.xlu0 %v417, 40
        %v643 = vpop.permute.xlu0 %642
        %v645 = vmul.f32 %v614, %v643
        %647 = vrot.lane.b32.xlu0 %v645, 96
        %v648 = vpop.permute.xlu0 %647
        %v650 = vadd.f32 %v641, %v648
        %v652 = vunpack.c.l.b16 %v628
        %v653 = vpack.c.b16 %v652, %v652
        %654 = vrot.lane.b32.xlu0 %v653, 96
        %v655 = vpop.permute.xlu0 %654
        %s657 = scalar_lea.vmem %s398, 4 [#allocation8]
        %658 = vst.msk [vmem:[%s657] sm:$0xf] %vm538, %v655
        %v659 = vpack.c.bf16 %v650, %v650
        %v661 = vunpack.c.l.b16 %v659
        %v662 = vpack.c.b16 %v661, %v661
        %663 = vrot.lane.b32.xlu0 %v662, 24
        %v664 = vpop.permute.xlu0 %663
        %666 = vst.msk [vmem:[%s657] sm:$0xf] %vm547, %v664
        %667 = vrot.lane.b32.xlu0 %v416, 16
        %v668 = vpop.permute.xlu0 %667
        %v670 = vmul.f32 %v614, %v668
        %671 = vrot.lane.b32.xlu0 %v417, 48
        %v672 = vpop.permute.xlu0 %671
        %v674 = vmul.f32 %v614, %v672
        %676 = vrot.lane.b32.xlu0 %v674, 96
        %v677 = vpop.permute.xlu0 %676
        %v679 = vadd.f32 %v670, %v677
        %680 = vrot.lane.b32.xlu0 %v653, 64
        %v681 = vpop.permute.xlu0 %680
        %s683 = scalar_lea.vmem %s398, 8 [#allocation8]
        %684 = vst.msk [vmem:[%s683] sm:$0xf] %vm538, %v681
        %v685 = vpack.c.bf16 %v679, %v679
        %v687 = vunpack.c.l.b16 %v685
        %v688 = vpack.c.b16 %v687, %v687
        %689 = vrot.lane.b32.xlu0 %v688, 16
        %v690 = vpop.permute.xlu0 %689
        %692 = vst.msk [vmem:[%s683] sm:$0xf] %vm547, %v690
        %693 = vrot.lane.b32.xlu0 %v416, 24
        %v694 = vpop.permute.xlu0 %693
        %v696 = vmul.f32 %v614, %v694
        %697 = vrot.lane.b32.xlu0 %v417, 56
        %v698 = vpop.permute.xlu0 %697
        %v700 = vmul.f32 %v614, %v698
        %702 = vrot.lane.b32.xlu0 %v700, 96
        %v703 = vpop.permute.xlu0 %702
        %v705 = vadd.f32 %v696, %v703
        %706 = vrot.lane.b32.xlu0 %v653, 32
        %v707 = vpop.permute.xlu0 %706
        %s709 = scalar_lea.vmem %s398, 12 [#allocation8]
        %710 = vst.msk [vmem:[%s709] sm:$0xf] %vm538, %v707
        %v711 = vpack.c.bf16 %v705, %v705
        %v713 = vunpack.c.l.b16 %v711
        %v714 = vpack.c.b16 %v713, %v713
        %715 = vrot.lane.b32.xlu0 %v714, 8
        %v716 = vpop.permute.xlu0 %715
        %718 = vst.msk [vmem:[%s709] sm:$0xf] %vm547, %v716
        %s719 = sand.u32 %s216, 1
        %s720 = scalar_lea.sflag [#allocation4], %s719
        %s721 = sand.u32 %s216, 1
        %s722 = smul.addr %s721, 16
        %s723 = scalar_lea.vmem [#allocation8], %s722
        %s724 = sand.u32 %s244, 1
        %s725 = scalar_lea.sflag [#allocation10], %s724
        %s726 = sand.u32 %s244, 1
        %s727 = smul.addr %s726, 4
        %s728 = scalar_lea.vmem [#allocation9], %s727
        // Predicated region
        $region61: #{tpu_custom_call.1} parent=47 // pred_check
          %p729 = pneg %p226
        $region62: #{tpu_custom_call.1} parent=47 // pred_check_branch
          %731 = sbr.rel (%p729) target = $region64
        $region63: #{tpu_custom_call.1} parent=47 // pred_region
          %s733 = ssub.s32 256, 256
          %734 = vsyncadd %s720, %s733
          %s735 = smul.addr %s34, 4
          %s736 = sadd.s32 %s35, %s735
          %s737 = smul.addr %s736, 64
          %s738 = scalar_lea.hbm %s7, %s737
          %s739 = sshll.u32 %s723, 4
          %s740 = int_to_ptr.vmem [resolvable:$true] %s739
          %745 = dma.vmem_to_hbm [thread:$0]  %s740, 256, %s738, %s720, 64, 64, 4
        $region64: #{tpu_custom_call.1} parent=47 // pred_fallthru
          _
        // Predicated region
        $region65: #{tpu_custom_call.1} parent=47 // pred_check
          %p746 = pneg %p254
        $region66: #{tpu_custom_call.1} parent=47 // pred_check_branch
          %748 = sbr.rel (%p746) target = $region68
        $region67: #{tpu_custom_call.1} parent=47 // pred_region
          %s750 = ssub.s32 64, 64
          %751 = vsyncadd %s725, %s750
          %s752 = sadd.s32 %s35, %s34
          %s753 = smul.addr %s752, 64
          %s754 = scalar_lea.hbm %s8, %s753
          %s756 = sshll.u32 %s728, 4
          %s757 = int_to_ptr.vmem [resolvable:$true] %s756
          %759 = dma.vmem_to_hbm [thread:$0]  %s757, 64, %s754, %s725
        $region68: #{tpu_custom_call.1} parent=47 // pred_fallthru
          _
      $region48: #{tpu_custom_call.1} parent=5 // pred_fallthru
        _
      %p760 = scmp.le.s32.totalorder 2, %s25
      // Predicated region
      $region69: #{tpu_custom_call.1} parent=5 // pred_check
        %p761 = pneg %p760
      $region70: #{tpu_custom_call.1} parent=5 // pred_check_branch
        %763 = sbr.rel (%p761) target = $region72
      $region71: #{tpu_custom_call.1} parent=5 // pred_region
        %s764 = ssub.s32 %s25, 2
        // Predicated region
        $region73: #{tpu_custom_call.1} parent=71 // pred_check
          %p765 = pneg %p232
        $region74: #{tpu_custom_call.1} parent=71 // pred_check_branch
          %767 = sbr.rel (%p765) target = $region76
        $region75: #{tpu_custom_call.1} parent=71 // pred_region
          %s768 = sand.u32 %s217, 1
          %s769 = scalar_lea.sflag [#allocation4], %s768
          %s770 = sand.u32 %s217, 1
          %s771 = smul.addr %s770, 16
          %s772 = scalar_lea.vmem [#allocation8], %s771
          %773 = dma.done %s769, 256
        $region76: #{tpu_custom_call.1} parent=71 // pred_fallthru
          _
        // Predicated region
        $region77: #{tpu_custom_call.1} parent=71 // pred_check
          %p774 = pneg %p260
        $region78: #{tpu_custom_call.1} parent=71 // pred_check_branch
          %776 = sbr.rel (%p774) target = $region80
        $region79: #{tpu_custom_call.1} parent=71 // pred_region
          %s777 = sand.u32 %s245, 1
          %s778 = scalar_lea.sflag [#allocation10], %s777
          %s779 = sand.u32 %s245, 1
          %s780 = smul.addr %s779, 4
          %s781 = scalar_lea.vmem [#allocation9], %s780
          %782 = dma.done %s778, 64
        $region80: #{tpu_custom_call.1} parent=71 // pred_fallthru
          _
      $region72: #{tpu_custom_call.1} parent=5 // pred_fallthru
        _
    $region6: #{tpu_custom_call.1} parent=1 // loop_footer
      %s29 = sadd.s32 1, %s25
    $region7: #{tpu_custom_call.1} parent=1 // loop_footer_branch
      %24 = sbr.rel target = $region3
    $region8: #{tpu_custom_call.1} parent=1 // loop_exit
      _
    %783 = vsyncpa [#allocation3], 1
    %s784 = scalar_lea.sflag [#allocation3], 1
    %785 = vsyncpa %s784, 1
    %786 = vsyncpa [#allocation6], 1
    %787 = vsyncpa [#allocation4], 1
    %s788 = scalar_lea.sflag [#allocation4], 1
    %789 = vsyncpa %s788, 1
    %790 = vsyncpa [#allocation10], 1
    %s791 = scalar_lea.sflag [#allocation10], 1
    %792 = vsyncpa %s791, 1

</llo_original>
